<compile_context>
chip_gen: v5e
topology: v5e:2x2
jax: 0.10.0
libtpu: 0.0.40
codegen_flags: <defaults>
</compile_context>

<pallas_src>
import functools

import jax
import jax.numpy as jnp
from jax.experimental import pallas as pl
from jax.experimental.pallas import tpu as pltpu

_LANE = 128
_SUBLANE = 8


def _round_up(x, m):
    return ((x + m - 1) // m) * m


def _vmem_capacity_bytes():
    """Physical VMEM capacity of the attached TPU (conservative fallback: 64 MiB)."""
    try:
        return int(pltpu.get_tpu_info().vmem_capacity_bytes)
    except Exception:
        return 64 << 20  # v7x-sized fallback is safe on every generation


def _make_mlp_kernel(num_linear):
    """Kernel applying `num_linear` Linear layers with ReLU between them (not after last)."""

    def kernel(x_ref, *refs):
        # refs = (w0, b0, w1, b1, ..., w_{L-1}, b_{L-1}, out_ref)
        out_ref = refs[-1]
        h = x_ref[...]
        for l in range(num_linear):
            w = refs[2 * l][...]
            b = refs[2 * l + 1][...]
            # MXU matmul in the weight dtype (bf16 stays bf16 -> full rate), f32 accumulate.
            acc = jnp.dot(h.astype(w.dtype), w, preferred_element_type=jnp.float32)
            acc = acc + b.astype(jnp.float32)
            if l < num_linear - 1:
                # ReLU in f32, then carry the activation in the weight dtype so the next
                # MXU pass sees native-rate operands and vreg pressure stays low.
                h = jnp.maximum(acc, 0.0).astype(w.dtype)
            else:
                h = acc
        out_ref[...] = h.astype(out_ref.dtype)

    return kernel


def init_ffn_params(key, input_dim, output_dim, num_hidden_layers, hidden_dim,
                    dtype=jnp.float32):
    """Deterministic init mimicking torch.nn.Linear default (U(-1/sqrt(fan_in), +...))."""
    dims = [input_dim] + [hidden_dim] * num_hidden_layers + [output_dim]
    params = []
    for i in range(len(dims) - 1):
        fan_in, fan_out = dims[i], dims[i + 1]
        key, kw, kb = jax.random.split(key, 3)
        bound = 1.0 / float(fan_in) ** 0.5
        # stored as [in, out] (transposed vs. PyTorch's [out, in]) -> h @ W + b on the MXU
        w = jax.random.uniform(kw, (fan_in, fan_out), dtype, -bound, bound)
        b = jax.random.uniform(kb, (1, fan_out), dtype, -bound, bound)
        params.append((w, b))
    return params


def prepare_ffn_params(params, compute_dtype=None):
    """Pad (and optionally cast) weights/biases to lane multiples ONCE, outside the hot path.

    Zero padding is exact: padded rows/cols and bias entries are 0, ReLU(0) = 0.
    Returns (padded_params, out_dim) where out_dim is the true (unpadded) output width.
    """
    dims = [params[0][0].shape[0]] + [w.shape[1] for w, _ in params]
    pdims = [_round_up(d, _LANE) for d in dims]
    padded = []
    for l, (w, b) in enumerate(params):
        if compute_dtype is not None:
            w = w.astype(compute_dtype)
            b = b.astype(compute_dtype)
        w_p = jnp.pad(w, ((0, pdims[l] - w.shape[0]), (0, pdims[l + 1] - w.shape[1])))
        b_p = jnp.pad(b, ((0, 0), (0, pdims[l + 1] - b.shape[1])))
        padded.append((w_p, b_p))
    return tuple(padded), dims[-1]


@functools.partial(jax.jit, static_argnames=("out_dim", "tile_b"))
def ffn_forward(x, padded_params, *, out_dim, tile_b=256):
    """Forward pass of FeedforwardNetwork via a single batch-tiled Pallas kernel."""
    B, d_in = x.shape
    num_linear = len(padded_params)
    compute_dtype = jnp.dtype(padded_params[0][0].dtype)
    out_itemsize = jnp.dtype(x.dtype).itemsize
    pdims = [padded_params[0][0].shape[0]] + [w.shape[1] for w, _ in padded_params]

    # ---- static tile_b selection (all trace-time Python on static shapes) ----
    tile_eff = max(_SUBLANE, min(tile_b, _round_up(B, _SUBLANE)))
    tile_eff = _round_up(tile_eff, _SUBLANE)
    # v7x megacore: prefer >=2 grid steps so the "parallel" axis shards across both TCs.
    while (tile_eff > _SUBLANE and tile_eff % 16 == 0
           and pl.cdiv(B, tile_eff) < 2 and pl.cdiv(B, tile_eff // 2) >= 2):
        tile_eff //= 2

    # ---- VMEM budget: weights single-buffered (Buffered(1)), x/out tiles double-buffered ----
    weight_bytes = sum(w.size * w.dtype.itemsize + b.size * b.dtype.itemsize
                       for w, b in padded_params)

    def _vmem_needed(tb):
        io = (2 * tb * pdims[0] * compute_dtype.itemsize
              + 2 * tb * pdims[-1] * out_itemsize)
        act = 2 * tb * max(pdims) * 4                 # f32 accumulator intermediates
        return weight_bytes + io + act + (4 << 20)    # + compiler scratch headroom

    vmem_cap = int(_vmem_capacity_bytes() * 0.85)     # ~54 MiB on v7x, ~108 MiB on v5e/v6e
    while _vmem_needed(tile_eff) > vmem_cap and tile_eff > _SUBLANE and tile_eff % 16 == 0:
        tile_eff //= 2
    vmem_needed = _vmem_needed(tile_eff)
    if vmem_needed > vmem_cap:
        # TODO(synk): K-tiled fallback (stream weights from HBM over an extra "arbitrary"
        # grid axis with a VMEM f32 accumulator) for models whose padded weights exceed
        # VMEM — hits first on v7x's 64 MiB.
        raise ValueError(
            f"FFN padded weights ({weight_bytes / 2**20:.1f} MiB) exceed the VMEM budget "
            f"({vmem_cap / 2**20:.1f} MiB); K-tiled fallback not implemented.")
    vmem_limit = int(min(max(vmem_needed, 32 << 20), vmem_cap))

    # ---- pad + cast only the streamed input (weights were pre-padded outside the jit) ----
    B_pad = _round_up(B, tile_eff)
    x_p = jnp.pad(x, ((0, B_pad - B), (0, pdims[0] - d_in))).astype(compute_dtype)

    grid = (B_pad // tile_eff,)

    # Input tile streams over batch; weights/biases are whole-array, constant-index blocks
    # kept VMEM-resident with a single pipeline buffer (never re-fetched, never doubled).
    in_specs = [pl.BlockSpec((tile_eff, pdims[0]), lambda i: (i, 0))]
    flat_args = [x_p]
    for w_p, b_p in padded_params:
        in_specs.append(pl.BlockSpec(w_p.shape, lambda i: (0, 0),
                                     pipeline_mode=pl.Buffered(1)))
        in_specs.append(pl.BlockSpec(b_p.shape, lambda i: (0, 0),
                                     pipeline_mode=pl.Buffered(1)))
        flat_args.append(w_p)
        flat_args.append(b_p)
    out_specs = pl.BlockSpec((tile_eff, pdims[-1]), lambda i: (i, 0))

    # ---- cost hint (actual work performed by the custom call, padded dims) ----
    flops = 2 * B_pad * sum(pdims[l] * pdims[l + 1] for l in range(num_linear))
    bytes_accessed = (x_p.size * x_p.dtype.itemsize + weight_bytes
                      + B_pad * pdims[-1] * out_itemsize)
    cost = pl.CostEstimate(flops=flops, transcendentals=0, bytes_accessed=bytes_accessed)

    out_p = pl.pallas_call(
        _make_mlp_kernel(num_linear),
        out_shape=jax.ShapeDtypeStruct((B_pad, pdims[-1]), x.dtype),
        grid_spec=pltpu.PrefetchScalarGridSpec(
            num_scalar_prefetch=0,
            grid=grid,
            in_specs=in_specs,
            out_specs=out_specs,
        ),
        compiler_params=pltpu.CompilerParams(
            dimension_semantics=("parallel",),
            vmem_limit_bytes=vmem_limit,
        ),
        cost_estimate=cost,
    )(*flat_args)

    return out_p[:B, :out_dim]


def ffn_reference(x, params):
    """Plain-JAX reference for correctness checking (f32 throughout)."""
    h = x.astype(jnp.float32)
    for l, (w, b) in enumerate(params):
        h = h @ w.astype(jnp.float32) + b.astype(jnp.float32)
        if l < len(params) - 1:
            h = jnp.maximum(h, 0.0)
    return h.astype(x.dtype)


if __name__ == "__main__":
    key = jax.random.PRNGKey(0)

    # --- small demo shapes consistent with the module ---
    batch, input_dim, hidden_dim, output_dim, num_hidden_layers = 8, 16, 32, 8, 3
    key, kx, kp = jax.random.split(key, 3)
    x = jax.random.normal(kx, (batch, input_dim), jnp.float32)
    params = init_ffn_params(kp, input_dim, output_dim, num_hidden_layers, hidden_dim)

    padded_params, d_out = prepare_ffn_params(params)          # pad once, outside hot path
    out = jax.block_until_ready(ffn_forward(x, padded_params, out_dim=d_out))
    ref = jax.block_until_ready(ffn_reference(x, params))
    assert out.shape == (batch, output_dim)
    assert jnp.allclose(out, ref, atol=1e-5, rtol=1e-5), "f32 small-shape mismatch"

    # --- multi-tile check: tile_b=256 auto-halves to 128 -> grid=(2,) exercises i>0,
    #     ragged feature padding, and gives the v7x megacore a 2-step parallel axis ---
    B2, d_in2, d_h2, d_out2 = 256, 48, 160, 24
    key, kx2, kp2 = jax.random.split(key, 3)
    x2 = jax.random.normal(kx2, (B2, d_in2), jnp.float32)
    params2 = init_ffn_params(kp2, d_in2, d_out2, 2, d_h2)
    padded2, do2 = prepare_ffn_params(params2)
    out2 = jax.block_until_ready(ffn_forward(x2, padded2, out_dim=do2))
    ref2 = jax.block_until_ready(ffn_reference(x2, params2))
    assert out2.shape == (B2, d_out2)
    assert jnp.allclose(out2, ref2, atol=1e-4, rtol=1e-4), "f32 multi-tile mismatch"

    # --- bf16 weights/activations path (full-rate MXU), f32 accumulation in-kernel ---
    padded2_bf16, do2_bf16 = prepare_ffn_params(params2, compute_dtype=jnp.bfloat16)
    out_bf16 = jax.block_until_ready(
        ffn_forward(x2.astype(jnp.bfloat16), padded2_bf16, out_dim=do2_bf16))
    assert out_bf16.shape == (B2, d_out2)
    assert jnp.allclose(out_bf16.astype(jnp.float32), ref2, atol=7.5e-2, rtol=5e-2), \
        "bf16 path mismatch vs f32 reference"

    print("KERNEL_OK")
</pallas_src>

<mosaic_0001>
module attributes {stable_mosaic.version = 11 : i64} {
  func.func @kernel(%arg0: i32, %arg1: memref<8x128xf32, #tpu.memory_space<vmem>>, %arg2: memref<128x128xf32, #tpu.memory_space<vmem>>, %arg3: memref<1x128xf32, #tpu.memory_space<vmem>>, %arg4: memref<128x128xf32, #tpu.memory_space<vmem>>, %arg5: memref<1x128xf32, #tpu.memory_space<vmem>>, %arg6: memref<128x128xf32, #tpu.memory_space<vmem>>, %arg7: memref<1x128xf32, #tpu.memory_space<vmem>>, %arg8: memref<128x128xf32, #tpu.memory_space<vmem>>, %arg9: memref<1x128xf32, #tpu.memory_space<vmem>>, %arg10: memref<8x128xf32, #tpu.memory_space<vmem>>) attributes {dimension_semantics = [#tpu.dimension_semantics<parallel>], iteration_bounds = array<i64: 1>, scalar_prefetch = 0 : i64, scratch_operands = 0 : i64, tpu.core_type = #tpu.core_type<tc>, window_params = [{transform_indices = @transform_0, window_bounds = array<i64: 8, 128>}, {pipeline_mode = #tpu.pipeline_mode<synchronous>, transform_indices = @transform_1, window_bounds = array<i64: 128, 128>}, {pipeline_mode = #tpu.pipeline_mode<synchronous>, transform_indices = @transform_2, window_bounds = array<i64: 1, 128>}, {pipeline_mode = #tpu.pipeline_mode<synchronous>, transform_indices = @transform_3, window_bounds = array<i64: 128, 128>}, {pipeline_mode = #tpu.pipeline_mode<synchronous>, transform_indices = @transform_4, window_bounds = array<i64: 1, 128>}, {pipeline_mode = #tpu.pipeline_mode<synchronous>, transform_indices = @transform_5, window_bounds = array<i64: 128, 128>}, {pipeline_mode = #tpu.pipeline_mode<synchronous>, transform_indices = @transform_6, window_bounds = array<i64: 1, 128>}, {pipeline_mode = #tpu.pipeline_mode<synchronous>, transform_indices = @transform_7, window_bounds = array<i64: 128, 128>}, {pipeline_mode = #tpu.pipeline_mode<synchronous>, transform_indices = @transform_8, window_bounds = array<i64: 1, 128>}, {transform_indices = @transform_9, window_bounds = array<i64: 8, 128>}]} {
    %c0 = arith.constant 0 : index
    %c0_0 = arith.constant 0 : index
    %0 = vector.load %arg1[%c0, %c0_0] : memref<8x128xf32, #tpu.memory_space<vmem>>, vector<8x128xf32>
    %c0_1 = arith.constant 0 : index
    %c0_2 = arith.constant 0 : index
    %1 = vector.load %arg2[%c0_1, %c0_2] : memref<128x128xf32, #tpu.memory_space<vmem>>, vector<128x128xf32>
    %c0_3 = arith.constant 0 : index
    %c0_4 = arith.constant 0 : index
    %2 = vector.load %arg3[%c0_3, %c0_4] : memref<1x128xf32, #tpu.memory_space<vmem>>, vector<1x128xf32>
    %cst = arith.constant dense<0.000000e+00> : vector<8x128xf32>
    %3 = tpu.matmul %0, %1, %cst {dimension_numbers = #tpu.dot_dimension_numbers<[1], [0], [0], [1], [0, 0, 1, 1], [], []>} : vector<8x128xf32>, vector<128x128xf32>, vector<8x128xf32> -> vector<8x128xf32>
    %4 = vector.broadcast %2 : vector<1x128xf32> to vector<8x128xf32>
    %5 = arith.addf %3, %4 : vector<8x128xf32>
    %cst_5 = arith.constant 0.000000e+00 : f32
    %6 = vector.broadcast %cst_5 : f32 to vector<8x128xf32>
    %7 = arith.maximumf %5, %6 : vector<8x128xf32>
    %c0_6 = arith.constant 0 : index
    %c0_7 = arith.constant 0 : index
    %8 = vector.load %arg4[%c0_6, %c0_7] : memref<128x128xf32, #tpu.memory_space<vmem>>, vector<128x128xf32>
    %c0_8 = arith.constant 0 : index
    %c0_9 = arith.constant 0 : index
    %9 = vector.load %arg5[%c0_8, %c0_9] : memref<1x128xf32, #tpu.memory_space<vmem>>, vector<1x128xf32>
    %cst_10 = arith.constant dense<0.000000e+00> : vector<8x128xf32>
    %10 = tpu.matmul %7, %8, %cst_10 {dimension_numbers = #tpu.dot_dimension_numbers<[1], [0], [0], [1], [0, 0, 1, 1], [], []>} : vector<8x128xf32>, vector<128x128xf32>, vector<8x128xf32> -> vector<8x128xf32>
    %11 = vector.broadcast %9 : vector<1x128xf32> to vector<8x128xf32>
    %12 = arith.addf %10, %11 : vector<8x128xf32>
    %cst_11 = arith.constant 0.000000e+00 : f32
    %13 = vector.broadcast %cst_11 : f32 to vector<8x128xf32>
    %14 = arith.maximumf %12, %13 : vector<8x128xf32>
    %c0_12 = arith.constant 0 : index
    %c0_13 = arith.constant 0 : index
    %15 = vector.load %arg6[%c0_12, %c0_13] : memref<128x128xf32, #tpu.memory_space<vmem>>, vector<128x128xf32>
    %c0_14 = arith.constant 0 : index
    %c0_15 = arith.constant 0 : index
    %16 = vector.load %arg7[%c0_14, %c0_15] : memref<1x128xf32, #tpu.memory_space<vmem>>, vector<1x128xf32>
    %cst_16 = arith.constant dense<0.000000e+00> : vector<8x128xf32>
    %17 = tpu.matmul %14, %15, %cst_16 {dimension_numbers = #tpu.dot_dimension_numbers<[1], [0], [0], [1], [0, 0, 1, 1], [], []>} : vector<8x128xf32>, vector<128x128xf32>, vector<8x128xf32> -> vector<8x128xf32>
    %18 = vector.broadcast %16 : vector<1x128xf32> to vector<8x128xf32>
    %19 = arith.addf %17, %18 : vector<8x128xf32>
    %cst_17 = arith.constant 0.000000e+00 : f32
    %20 = vector.broadcast %cst_17 : f32 to vector<8x128xf32>
    %21 = arith.maximumf %19, %20 : vector<8x128xf32>
    %c0_18 = arith.constant 0 : index
    %c0_19 = arith.constant 0 : index
    %22 = vector.load %arg8[%c0_18, %c0_19] : memref<128x128xf32, #tpu.memory_space<vmem>>, vector<128x128xf32>
    %c0_20 = arith.constant 0 : index
    %c0_21 = arith.constant 0 : index
    %23 = vector.load %arg9[%c0_20, %c0_21] : memref<1x128xf32, #tpu.memory_space<vmem>>, vector<1x128xf32>
    %cst_22 = arith.constant dense<0.000000e+00> : vector<8x128xf32>
    %24 = tpu.matmul %21, %22, %cst_22 {dimension_numbers = #tpu.dot_dimension_numbers<[1], [0], [0], [1], [0, 0, 1, 1], [], []>} : vector<8x128xf32>, vector<128x128xf32>, vector<8x128xf32> -> vector<8x128xf32>
    %25 = vector.broadcast %23 : vector<1x128xf32> to vector<8x128xf32>
    %26 = arith.addf %24, %25 : vector<8x128xf32>
    %c0_23 = arith.constant 0 : index
    %c0_24 = arith.constant 0 : index
    %27 = vector.load %arg10[%c0_23, %c0_24] : memref<8x128xf32, #tpu.memory_space<vmem>>, vector<8x128xf32>
    tpu.vector_store %arg10[%c0_23, %c0_24], %26 {strides = array<i32>} : memref<8x128xf32, #tpu.memory_space<vmem>>, vector<8x128xf32>,
    return
  }
  func.func @transform_0(%arg0: i32) -> (i32, i32) {
    %c0_i32 = arith.constant 0 : i32
    %c0_i32_0 = arith.constant 0 : i32
    return %arg0, %c0_i32 : i32, i32
  }
  func.func @transform_1(%arg0: i32) -> (i32, i32) {
    %c0_i32 = arith.constant 0 : i32
    %c0_i32_0 = arith.constant 0 : i32
    %c0_i32_1 = arith.constant 0 : i32
    return %c0_i32, %c0_i32_0 : i32, i32
  }
  func.func @transform_2(%arg0: i32) -> (i32, i32) {
    %c0_i32 = arith.constant 0 : i32
    %c0_i32_0 = arith.constant 0 : i32
    %c0_i32_1 = arith.constant 0 : i32
    return %c0_i32, %c0_i32_0 : i32, i32
  }
  func.func @transform_3(%arg0: i32) -> (i32, i32) {
    %c0_i32 = arith.constant 0 : i32
    %c0_i32_0 = arith.constant 0 : i32
    %c0_i32_1 = arith.constant 0 : i32
    return %c0_i32, %c0_i32_0 : i32, i32
  }
  func.func @transform_4(%arg0: i32) -> (i32, i32) {
    %c0_i32 = arith.constant 0 : i32
    %c0_i32_0 = arith.constant 0 : i32
    %c0_i32_1 = arith.constant 0 : i32
    return %c0_i32, %c0_i32_0 : i32, i32
  }
  func.func @transform_5(%arg0: i32) -> (i32, i32) {
    %c0_i32 = arith.constant 0 : i32
    %c0_i32_0 = arith.constant 0 : i32
    %c0_i32_1 = arith.constant 0 : i32
    return %c0_i32, %c0_i32_0 : i32, i32
  }
  func.func @transform_6(%arg0: i32) -> (i32, i32) {
    %c0_i32 = arith.constant 0 : i32
    %c0_i32_0 = arith.constant 0 : i32
    %c0_i32_1 = arith.constant 0 : i32
    return %c0_i32, %c0_i32_0 : i32, i32
  }
  func.func @transform_7(%arg0: i32) -> (i32, i32) {
    %c0_i32 = arith.constant 0 : i32
    %c0_i32_0 = arith.constant 0 : i32
    %c0_i32_1 = arith.constant 0 : i32
    return %c0_i32, %c0_i32_0 : i32, i32
  }
  func.func @transform_8(%arg0: i32) -> (i32, i32) {
    %c0_i32 = arith.constant 0 : i32
    %c0_i32_0 = arith.constant 0 : i32
    %c0_i32_1 = arith.constant 0 : i32
    return %c0_i32, %c0_i32_0 : i32, i32
  }
  func.func @transform_9(%arg0: i32) -> (i32, i32) {
    %c0_i32 = arith.constant 0 : i32
    %c0_i32_0 = arith.constant 0 : i32
    return %arg0, %c0_i32 : i32, i32
  }
}

</mosaic_0001>

<llo_original>
// kernel: ffn_forward.1
$region0: #{ffn_forward.1}
  #allocation0 [shape = 'u32[]', space=smem, size = 0x4, offset = 0x4, fixed_abs, tag = 'smem constant byte address 0x4 - core index']
  #allocation1 [shape = 'u32[72,128]{1,0:T(1,128)}', space=vmem, size = 0x9000, scoped, tag = 'internal scratch']
  %s0 = inlined_call_operand.vmem [shape: f32[8,128], index: 0, kind: input, shape index: {}]
  %s1 = inlined_call_operand.hbm [shape: f32[128,128], index: 1, kind: input, shape index: {}]
  %s2 = inlined_call_operand.vmem [shape: f32[1,128], index: 2, kind: input, shape index: {}]
  %s3 = inlined_call_operand.hbm [shape: f32[128,128], index: 3, kind: input, shape index: {}]
  %s4 = inlined_call_operand.vmem [shape: f32[1,128], index: 4, kind: input, shape index: {}]
  %s5 = inlined_call_operand.hbm [shape: f32[128,128], index: 5, kind: input, shape index: {}]
  %s6 = inlined_call_operand.vmem [shape: f32[1,128], index: 6, kind: input, shape index: {}]
  %s7 = inlined_call_operand.hbm [shape: f32[128,128], index: 7, kind: input, shape index: {}]
  %s8 = inlined_call_operand.vmem [shape: f32[1,128], index: 8, kind: input, shape index: {}]
  %s9 = inlined_call_operand.hbm [shape: f32[8,128], index: 9, kind: output, shape index: {}]
  %s10 = sld [smem:[#allocation0]]
  $region62: #{ffn_forward.1} parent=0
    _
  %s12 = ssub.s32 1, %s10
  %s13 = scalar_select 0, %s12, %s10
  $region1: #{ffn_forward.1} parent=0
    #allocation2 [shape = 'u8[65536]{0}', space=vmem, size = 0x10000, scoped, tag = 'input window, operand 1, single buffered']
    #allocation3 [shape = 's32[1]{0}', space=sflag, size = 0x4, scoped, tag = 'scoped memory for ffn_forward.1']
    #allocation4 [shape = 's32[1]{0}', space=sflag, size = 0x4, scoped, tag = 'scoped memory for ffn_forward.1']
    #allocation5 [shape = 'u8[65536]{0}', space=vmem, size = 0x10000, scoped, tag = 'input window, operand 3, single buffered']
    #allocation6 [shape = 's32[1]{0}', space=sflag, size = 0x4, scoped, tag = 'scoped memory for ffn_forward.1']
    #allocation7 [shape = 'u8[65536]{0}', space=vmem, size = 0x10000, scoped, tag = 'input window, operand 5, single buffered']
    #allocation8 [shape = 'u8[65536]{0}', space=vmem, size = 0x10000, scoped, tag = 'input window, operand 7, single buffered']
    #allocation9 [shape = 's32[1]{0}', space=sflag, size = 0x4, scoped, tag = 'scoped memory for ffn_forward.1']
    #allocation10 [shape = 'u8[4096]{0}', space=vmem, size = 0x1000, scoped, tag = 'output window, operand 0, single buffered']
    %14 = vsyncpa [#allocation3], 0
    %15 = vsyncpa [#allocation6], 0
    %16 = vsyncpa [#allocation9], 0
    %17 = vsyncpa [#allocation4], 0
    // Predicated region
    $region2: #{ffn_forward.1} parent=1 // pred_check
      _
    $region3: #{ffn_forward.1} parent=1 // pred_check_branch
      %19 = sbr.rel (0) target = $region5
    $region4: #{ffn_forward.1} parent=1 // pred_region
      _
    $region5: #{ffn_forward.1} parent=1 // pred_fallthru
      _
    // Predicated region
    $region6: #{ffn_forward.1} parent=1 // pred_check
      _
    $region7: #{ffn_forward.1} parent=1 // pred_check_branch
      %21 = sbr.rel (0) target = $region9
    $region8: #{ffn_forward.1} parent=1 // pred_region
      %23 = vsyncadd [#allocation3], 0
      %s24 = sshll.u32 %s1, 4
      %s25 = int_to_ptr.hbm [resolvable:$true] %s24
      %s26 = sshll.u32 [#allocation2], 4
      %s27 = int_to_ptr.vmem [resolvable:$true] %s26
      %32 = dma.hbm_to_vmem [thread:$0]  %s25, 2048, %s27, [#allocation3], 128, 128, 8
    $region9: #{ffn_forward.1} parent=1 // pred_fallthru
      _
    // Predicated region
    $region10: #{ffn_forward.1} parent=1 // pred_check
      _
    $region11: #{ffn_forward.1} parent=1 // pred_check_branch
      %34 = sbr.rel (0) target = $region13
    $region12: #{ffn_forward.1} parent=1 // pred_region
      _
    $region13: #{ffn_forward.1} parent=1 // pred_fallthru
      _
    // Predicated region
    $region14: #{ffn_forward.1} parent=1 // pred_check
      _
    $region15: #{ffn_forward.1} parent=1 // pred_check_branch
      %36 = sbr.rel (0) target = $region17
    $region16: #{ffn_forward.1} parent=1 // pred_region
      %38 = vsyncadd [#allocation6], 0
      %s39 = sshll.u32 %s3, 4
      %s40 = int_to_ptr.hbm [resolvable:$true] %s39
      %s41 = sshll.u32 [#allocation5], 4
      %s42 = int_to_ptr.vmem [resolvable:$true] %s41
      %47 = dma.hbm_to_vmem [thread:$0]  %s40, 2048, %s42, [#allocation6], 128, 128, 8
    $region17: #{ffn_forward.1} parent=1 // pred_fallthru
      _
    // Predicated region
    $region18: #{ffn_forward.1} parent=1 // pred_check
      _
    $region19: #{ffn_forward.1} parent=1 // pred_check_branch
      %49 = sbr.rel (0) target = $region21
    $region20: #{ffn_forward.1} parent=1 // pred_region
      _
    $region21: #{ffn_forward.1} parent=1 // pred_fallthru
      _
    // Predicated region
    $region22: #{ffn_forward.1} parent=1 // pred_check
      _
    $region23: #{ffn_forward.1} parent=1 // pred_check_branch
      %51 = sbr.rel (0) target = $region25
    $region24: #{ffn_forward.1} parent=1 // pred_region
      %53 = vsyncadd [#allocation6], 0
      %s54 = sshll.u32 %s5, 4
      %s55 = int_to_ptr.hbm [resolvable:$true] %s54
      %s56 = sshll.u32 [#allocation7], 4
      %s57 = int_to_ptr.vmem [resolvable:$true] %s56
      %62 = dma.hbm_to_vmem [thread:$0]  %s55, 2048, %s57, [#allocation6], 128, 128, 8
    $region25: #{ffn_forward.1} parent=1 // pred_fallthru
      _
    // Predicated region
    $region26: #{ffn_forward.1} parent=1 // pred_check
      _
    $region27: #{ffn_forward.1} parent=1 // pred_check_branch
      %64 = sbr.rel (0) target = $region29
    $region28: #{ffn_forward.1} parent=1 // pred_region
      _
    $region29: #{ffn_forward.1} parent=1 // pred_fallthru
      _
    // Predicated region
    $region30: #{ffn_forward.1} parent=1 // pred_check
      _
    $region31: #{ffn_forward.1} parent=1 // pred_check_branch
      %66 = sbr.rel (0) target = $region33
    $region32: #{ffn_forward.1} parent=1 // pred_region
      %68 = vsyncadd [#allocation9], 0
      %s69 = sshll.u32 %s7, 4
      %s70 = int_to_ptr.hbm [resolvable:$true] %s69
      %s71 = sshll.u32 [#allocation8], 4
      %s72 = int_to_ptr.vmem [resolvable:$true] %s71
      %77 = dma.hbm_to_vmem [thread:$0]  %s70, 2048, %s72, [#allocation9], 128, 128, 8
    $region33: #{ffn_forward.1} parent=1 // pred_fallthru
      _
    // Predicated region
    $region34: #{ffn_forward.1} parent=1 // pred_check
      _
    $region35: #{ffn_forward.1} parent=1 // pred_check_branch
      %79 = sbr.rel (0) target = $region37
    $region36: #{ffn_forward.1} parent=1 // pred_region
      _
    $region37: #{ffn_forward.1} parent=1 // pred_fallthru
      _
    // Predicated region
    $region38: #{ffn_forward.1} parent=1 // pred_check
      _
    $region39: #{ffn_forward.1} parent=1 // pred_check_branch
      %81 = sbr.rel (0) target = $region41
    $region40: #{ffn_forward.1} parent=1 // pred_region
      %83 = dma.done [#allocation3], 2048
    $region41: #{ffn_forward.1} parent=1 // pred_fallthru
      _
    // Predicated region
    $region42: #{ffn_forward.1} parent=1 // pred_check
      _
    $region43: #{ffn_forward.1} parent=1 // pred_check_branch
      %85 = sbr.rel (0) target = $region45
    $region44: #{ffn_forward.1} parent=1 // pred_region
      %87 = dma.done [#allocation6], 2048
    $region45: #{ffn_forward.1} parent=1 // pred_fallthru
      _
    // Predicated region
    $region46: #{ffn_forward.1} parent=1 // pred_check
      _
    $region47: #{ffn_forward.1} parent=1 // pred_check_branch
      %89 = sbr.rel (0) target = $region49
    $region48: #{ffn_forward.1} parent=1 // pred_region
      %91 = dma.done [#allocation6], 2048
    $region49: #{ffn_forward.1} parent=1 // pred_fallthru
      _
    // Predicated region
    $region50: #{ffn_forward.1} parent=1 // pred_check
      _
    $region51: #{ffn_forward.1} parent=1 // pred_check_branch
      %93 = sbr.rel (0) target = $region53
    $region52: #{ffn_forward.1} parent=1 // pred_region
      %95 = dma.done [#allocation9], 2048
    $region53: #{ffn_forward.1} parent=1 // pred_fallthru
      _
    %v96 = vld [vmem:[%s0] sm:$0xff]
    %v97 = vld [vmem:[#allocation2] sm:$0xff]
    %v98 = vld [vmem:[#allocation2 + $0x8] sm:$0xff]
    %v99 = vld [vmem:[#allocation2 + $0x10] sm:$0xff]
    %v100 = vld [vmem:[#allocation2 + $0x18] sm:$0xff]
    %v101 = vld [vmem:[#allocation2 + $0x20] sm:$0xff]
    %v102 = vld [vmem:[#allocation2 + $0x28] sm:$0xff]
    %v103 = vld [vmem:[#allocation2 + $0x30] sm:$0xff]
    %v104 = vld [vmem:[#allocation2 + $0x38] sm:$0xff]
    %v105 = vld [vmem:[#allocation2 + $0x40] sm:$0xff]
    %v106 = vld [vmem:[#allocation2 + $0x48] sm:$0xff]
    %v107 = vld [vmem:[#allocation2 + $0x50] sm:$0xff]
    %v108 = vld [vmem:[#allocation2 + $0x58] sm:$0xff]
    %v109 = vld [vmem:[#allocation2 + $0x60] sm:$0xff]
    %v110 = vld [vmem:[#allocation2 + $0x68] sm:$0xff]
    %v111 = vld [vmem:[#allocation2 + $0x70] sm:$0xff]
    %v112 = vld [vmem:[#allocation2 + $0x78] sm:$0xff]
    %v113 = vld [vmem:[%s2] sm:$0x1]
    %v115 = vperm.slane %v113, 0
    %117 = vmatpush.msra.mxu0 %v112
    %118 = vmatpush.msra.mxu0 %v111
    %119 = vmatpush.msra.mxu0 %v110
    %120 = vmatpush.msra.mxu0 %v109
    %121 = vmatpush.msra.mxu0 %v108
    %122 = vmatpush.msra.mxu0 %v107
    %123 = vmatpush.msra.mxu0 %v106
    %124 = vmatpush.msra.mxu0 %v105
    %125 = vmatpush.msra.mxu0 %v104
    %126 = vmatpush.msra.mxu0 %v103
    %127 = vmatpush.msra.mxu0 %v102
    %128 = vmatpush.msra.mxu0 %v101
    %129 = vmatpush.msra.mxu0 %v100
    %130 = vmatpush.msra.mxu0 %v99
    %131 = vmatpush.msra.mxu0 %v98
    %132 = vmatpush.msra.mxu0 %v97
    %133 = vmatmul.f32.gmra.mxu0 %v96
    %v134 = vpop.f32.mrf.mxu0
    %v135 = vadd.f32 %v115, %v134
    %136 = vdwg.mxu0
    %v137 = vmax.f32 %v135, 0.0
    %v138 = vld [vmem:[#allocation5] sm:$0xff]
    %v139 = vld [vmem:[#allocation5 + $0x8] sm:$0xff]
    %v140 = vld [vmem:[#allocation5 + $0x10] sm:$0xff]
    %v141 = vld [vmem:[#allocation5 + $0x18] sm:$0xff]
    %v142 = vld [vmem:[#allocation5 + $0x20] sm:$0xff]
    %v143 = vld [vmem:[#allocation5 + $0x28] sm:$0xff]
    %v144 = vld [vmem:[#allocation5 + $0x30] sm:$0xff]
    %v145 = vld [vmem:[#allocation5 + $0x38] sm:$0xff]
    %v146 = vld [vmem:[#allocation5 + $0x40] sm:$0xff]
    %v147 = vld [vmem:[#allocation5 + $0x48] sm:$0xff]
    %v148 = vld [vmem:[#allocation5 + $0x50] sm:$0xff]
    %v149 = vld [vmem:[#allocation5 + $0x58] sm:$0xff]
    %v150 = vld [vmem:[#allocation5 + $0x60] sm:$0xff]
    %v151 = vld [vmem:[#allocation5 + $0x68] sm:$0xff]
    %v152 = vld [vmem:[#allocation5 + $0x70] sm:$0xff]
    %v153 = vld [vmem:[#allocation5 + $0x78] sm:$0xff]
    %v154 = vld [vmem:[%s4] sm:$0x1]
    %v156 = vperm.slane %v154, 0
    %158 = vmatpush.msra.mxu0 %v153
    %159 = vmatpush.msra.mxu0 %v152
    %160 = vmatpush.msra.mxu0 %v151
    %161 = vmatpush.msra.mxu0 %v150
    %162 = vmatpush.msra.mxu0 %v149
    %163 = vmatpush.msra.mxu0 %v148
    %164 = vmatpush.msra.mxu0 %v147
    %165 = vmatpush.msra.mxu0 %v146
    %166 = vmatpush.msra.mxu0 %v145
    %167 = vmatpush.msra.mxu0 %v144
    %168 = vmatpush.msra.mxu0 %v143
    %169 = vmatpush.msra.mxu0 %v142
    %170 = vmatpush.msra.mxu0 %v141
    %171 = vmatpush.msra.mxu0 %v140
    %172 = vmatpush.msra.mxu0 %v139
    %173 = vmatpush.msra.mxu0 %v138
    %174 = vmatmul.f32.gmra.mxu0 %v137
    %v175 = vpop.f32.mrf.mxu0
    %v176 = vadd.f32 %v156, %v175
    %177 = vdwg.mxu0
    %v178 = vmax.f32 %v176, 0.0
    %v179 = vld [vmem:[#allocation7] sm:$0xff]
    %v180 = vld [vmem:[#allocation7 + $0x8] sm:$0xff]
    %v181 = vld [vmem:[#allocation7 + $0x10] sm:$0xff]
    %v182 = vld [vmem:[#allocation7 + $0x18] sm:$0xff]
    %v183 = vld [vmem:[#allocation7 + $0x20] sm:$0xff]
    %v184 = vld [vmem:[#allocation7 + $0x28] sm:$0xff]
    %v185 = vld [vmem:[#allocation7 + $0x30] sm:$0xff]
    %v186 = vld [vmem:[#allocation7 + $0x38] sm:$0xff]
    %v187 = vld [vmem:[#allocation7 + $0x40] sm:$0xff]
    %v188 = vld [vmem:[#allocation7 + $0x48] sm:$0xff]
    %v189 = vld [vmem:[#allocation7 + $0x50] sm:$0xff]
    %v190 = vld [vmem:[#allocation7 + $0x58] sm:$0xff]
    %v191 = vld [vmem:[#allocation7 + $0x60] sm:$0xff]
    %v192 = vld [vmem:[#allocation7 + $0x68] sm:$0xff]
    %v193 = vld [vmem:[#allocation7 + $0x70] sm:$0xff]
    %v194 = vld [vmem:[#allocation7 + $0x78] sm:$0xff]
    %v195 = vld [vmem:[%s6] sm:$0x1]
    %v197 = vperm.slane %v195, 0
    %199 = vmatpush.msra.mxu0 %v194
    %200 = vmatpush.msra.mxu0 %v193
    %201 = vmatpush.msra.mxu0 %v192
    %202 = vmatpush.msra.mxu0 %v191
    %203 = vmatpush.msra.mxu0 %v190
    %204 = vmatpush.msra.mxu0 %v189
    %205 = vmatpush.msra.mxu0 %v188
    %206 = vmatpush.msra.mxu0 %v187
    %207 = vmatpush.msra.mxu0 %v186
    %208 = vmatpush.msra.mxu0 %v185
    %209 = vmatpush.msra.mxu0 %v184
    %210 = vmatpush.msra.mxu0 %v183
    %211 = vmatpush.msra.mxu0 %v182
    %212 = vmatpush.msra.mxu0 %v181
    %213 = vmatpush.msra.mxu0 %v180
    %214 = vmatpush.msra.mxu0 %v179
    %215 = vmatmul.f32.gmra.mxu0 %v178
    %v216 = vpop.f32.mrf.mxu0
    %v217 = vadd.f32 %v197, %v216
    %218 = vdwg.mxu0
    %v219 = vmax.f32 %v217, 0.0
    %v220 = vld [vmem:[#allocation8] sm:$0xff]
    %v221 = vld [vmem:[#allocation8 + $0x8] sm:$0xff]
    %v222 = vld [vmem:[#allocation8 + $0x10] sm:$0xff]
    %v223 = vld [vmem:[#allocation8 + $0x18] sm:$0xff]
    %v224 = vld [vmem:[#allocation8 + $0x20] sm:$0xff]
    %v225 = vld [vmem:[#allocation8 + $0x28] sm:$0xff]
    %v226 = vld [vmem:[#allocation8 + $0x30] sm:$0xff]
    %v227 = vld [vmem:[#allocation8 + $0x38] sm:$0xff]
    %v228 = vld [vmem:[#allocation8 + $0x40] sm:$0xff]
    %v229 = vld [vmem:[#allocation8 + $0x48] sm:$0xff]
    %v230 = vld [vmem:[#allocation8 + $0x50] sm:$0xff]
    %v231 = vld [vmem:[#allocation8 + $0x58] sm:$0xff]
    %v232 = vld [vmem:[#allocation8 + $0x60] sm:$0xff]
    %v233 = vld [vmem:[#allocation8 + $0x68] sm:$0xff]
    %v234 = vld [vmem:[#allocation8 + $0x70] sm:$0xff]
    %v235 = vld [vmem:[#allocation8 + $0x78] sm:$0xff]
    %v236 = vld [vmem:[%s8] sm:$0x1]
    %v238 = vperm.slane %v236, 0
    %240 = vmatpush.msra.mxu0 %v235
    %241 = vmatpush.msra.mxu0 %v234
    %242 = vmatpush.msra.mxu0 %v233
    %243 = vmatpush.msra.mxu0 %v232
    %244 = vmatpush.msra.mxu0 %v231
    %245 = vmatpush.msra.mxu0 %v230
    %246 = vmatpush.msra.mxu0 %v229
    %247 = vmatpush.msra.mxu0 %v228
    %248 = vmatpush.msra.mxu0 %v227
    %249 = vmatpush.msra.mxu0 %v226
    %250 = vmatpush.msra.mxu0 %v225
    %251 = vmatpush.msra.mxu0 %v224
    %252 = vmatpush.msra.mxu0 %v223
    %253 = vmatpush.msra.mxu0 %v222
    %254 = vmatpush.msra.mxu0 %v221
    %255 = vmatpush.msra.mxu0 %v220
    %256 = vmatmul.f32.gmra.mxu0 %v219
    %v257 = vpop.f32.mrf.mxu0
    %v258 = vadd.f32 %v238, %v257
    %259 = vdwg.mxu0
    %260 = vst [vmem:[#allocation10] sm:$0xff] %v258
    // Predicated region
    $region54: #{ffn_forward.1} parent=1 // pred_check
      _
    $region55: #{ffn_forward.1} parent=1 // pred_check_branch
      %262 = sbr.rel (0) target = $region57
    $region56: #{ffn_forward.1} parent=1 // pred_region
      %264 = vsyncadd [#allocation4], 0
      %s266 = sshll.u32 [#allocation10], 4
      %s267 = int_to_ptr.vmem [resolvable:$true] %s266
      %s268 = sshll.u32 %s9, 4
      %s269 = int_to_ptr.hbm [resolvable:$true] %s268
      %271 = dma.vmem_to_hbm [thread:$0]  %s267, 128, %s269, [#allocation4]
    $region57: #{ffn_forward.1} parent=1 // pred_fallthru
      _
    // Predicated region
    $region58: #{ffn_forward.1} parent=1 // pred_check
      _
    $region59: #{ffn_forward.1} parent=1 // pred_check_branch
      %273 = sbr.rel (0) target = $region61
    $region60: #{ffn_forward.1} parent=1 // pred_region
      %275 = dma.done [#allocation4], 128
    $region61: #{ffn_forward.1} parent=1 // pred_fallthru
      _
    %276 = vsyncpa [#allocation3], 1
    %277 = vsyncpa [#allocation6], 1
    %278 = vsyncpa [#allocation9], 1
    %279 = vsyncpa [#allocation4], 1

</llo_original>
